<compile_context>
chip_gen: v7x
topology: tpu7x:2x2x1
jax: 0.10.0
libtpu: 0.0.40
codegen_flags: <defaults>
</compile_context>

<pallas_src>
import jax
import jax.numpy as jnp
from jax.experimental import pallas as pl
from jax.experimental.pallas import tpu as pltpu


def critic_decoder_kernel(
    x_ref,      # (TB, N, D)  batch tile of node embeddings
    w01_ref,    # (D, D)      (Wg + Wn) @ W1, pre-folded, (in, out)
    b1_ref,     # (1, D)
    w2_ref,     # (D, D2)     MLP layer 2, (in, out)
    b2_ref,     # (1, D2)
    w3_ref,     # (1, D2)     MLP output weight as a row
    b3_ref,     # (1,)        output bias, SMEM scalar
    out_ref,    # (TB, 128)   lane-dense output; value broadcast across lanes
):
    # Mean over nodes: sublane-axis reduce (XLU); this is the only large read, the rest of
    # the kernel operates on (TB, D)-sized tiles only.
    mean_pool = jnp.mean(x_ref[...], axis=1).astype(jnp.float32)             # (TB, D)

    # Folded graph/node projection + MLP layer 1 (single MXU pass), then ReLU.
    h1 = jnp.dot(mean_pool, w01_ref[...],
                 preferred_element_type=jnp.float32) + b1_ref[...]           # (TB, D)
    h1 = jnp.maximum(h1, 0.0)

    # MLP layer 2 + ReLU.
    h2 = jnp.dot(h1, w2_ref[...],
                 preferred_element_type=jnp.float32) + b2_ref[...]           # (TB, D2)
    h2 = jnp.maximum(h2, 0.0)

    # Final Linear(D2, 1) on VPU/XLU: multiply by the weight row, lane-reduce, add SMEM bias.
    val = jnp.sum(h2 * w3_ref[...], axis=-1, keepdims=True) + b3_ref[0]      # (TB, 1)

    # Lane-dense store (unmasked vst); the wrapper slices column 0.
    out_ref[...] = jnp.broadcast_to(val, out_ref.shape).astype(out_ref.dtype)


def critic_decoder(x, params, block_b=None):
    """x: (B, N, D). params: dict of weights in (in, out) layout. Returns (B, 1) float32."""
    B, N, D = x.shape

    # Pre-fold: mean_N(x@Wn + mean_pool@Wg) @ W1 == mean_pool @ ((Wn + Wg) @ W1).
    # One tiny (D,D)x(D,D) matmul outside the kernel (constant-folded under jit for fixed
    # params); removes one MXU pass per batch tile and one resident (D,D) weight from VMEM.
    w01 = (params["wg"] + params["wn"]) @ params["w1"]

    # Batch tile: the output block's second-to-last dim must be 8-aligned unless a single
    # block covers the whole output. Pick the largest tile whose double-buffered x slab fits
    # in ~8 MiB of VMEM (conservative across v5e/v6e/v7x default scoped-VMEM limits).
    if block_b is None:
        per_row_bytes = N * D * x.dtype.itemsize
        block_b = max(8, ((8 << 20) // (2 * per_row_bytes)) // 8 * 8)
    if block_b >= B:
        block_b = B
    else:
        block_b = max(8, (block_b // 8) * 8)
        if block_b > B:
            block_b = B

    grid_b = pl.cdiv(B, block_b)
    b_pad = grid_b * block_b
    out_lanes = 128  # lane-dense output; the real value lives in column 0

    def const_spec(a):
        nd = a.ndim
        return pl.BlockSpec(a.shape, lambda b, _nd=nd: (0,) * _nd)

    in_specs = [
        pl.BlockSpec((block_b, N, D), lambda b: (b, 0, 0)),        # x, tiled over batch
        const_spec(w01),                                           # weights: VMEM-resident
        const_spec(params["b1"]),
        const_spec(params["w2"]), const_spec(params["b2"]),
        const_spec(params["w3"]),
        pl.BlockSpec(memory_space=pltpu.MemorySpace.SMEM),         # b3 scalar in SMEM
    ]
    out_spec = pl.BlockSpec((block_b, out_lanes), lambda b: (b, 0))

    out_padded = pl.pallas_call(
        critic_decoder_kernel,
        out_shape=jax.ShapeDtypeStruct((b_pad, out_lanes), jnp.float32),
        grid=(grid_b,),
        in_specs=in_specs,
        out_specs=out_spec,
        compiler_params=pltpu.CompilerParams(
            # batch tiles are independent -> shard across TCs on v7x; harmless on v5e/v6e
            dimension_semantics=("parallel",),
        ),
    )(x, w01, params["b1"], params["w2"], params["b2"], params["w3"], params["b3"])

    return out_padded[:B, 0:1]


def init_params(key, D):
    """Deterministic init mimicking PyTorch defaults (uniform +/- 1/sqrt(fan_in)).
    Weights stored (in, out), i.e. pre-transposed vs nn.Linear; w3 stored as a (1, D2) row."""
    D2 = D // 2
    ks = jax.random.split(key, 8)

    def unif(k, shape, fan_in):
        bound = 1.0 / jnp.sqrt(fan_in)
        return jax.random.uniform(k, shape, jnp.float32, -bound, bound)

    return {
        "wg": unif(ks[0], (D, D), D),
        "wn": unif(ks[1], (D, D), D),
        "w1": unif(ks[2], (D, D), D),
        "b1": unif(ks[3], (1, D), D),
        "w2": unif(ks[4], (D, D2), D),
        "b2": unif(ks[5], (1, D2), D),
        "w3": unif(ks[6], (1, D2), D2),
        "b3": unif(ks[7], (1,), D2),
    }


def reference_forward(x, p):
    """Pure-JAX reference of the PyTorch forward (eval mode), WITHOUT any algebraic folds."""
    mean_pool = x.mean(axis=1)
    graph = mean_pool @ p["wg"]
    node = jnp.einsum("bnd,de->bne", x, p["wn"])
    fusion = node + graph[:, None, :]
    h = fusion.mean(axis=1)
    h1 = jnp.maximum(h @ p["w1"] + p["b1"], 0.0)
    h2 = jnp.maximum(h1 @ p["w2"] + p["b2"], 0.0)
    return h2 @ p["w3"].T + p["b3"]


if __name__ == "__main__":
    B, N, D = 16, 8, 32  # batch, nodes, embedding dim (input_dim)

    key = jax.random.PRNGKey(0)
    k_x, k_p = jax.random.split(key)
    x = jax.random.normal(k_x, (B, N, D), dtype=jnp.float32)
    params = init_params(k_p, D)

    # block_b=8 -> 2 grid steps, exercising the double-buffered batch pipeline.
    out = critic_decoder(x, params, block_b=8)
    out = jax.block_until_ready(out)

    ref = reference_forward(x, params)
    assert out.shape == (B, 1), out.shape
    assert jnp.allclose(out, ref, atol=5e-4, rtol=5e-4), (out, ref)

    print("KERNEL_OK")
</pallas_src>

<mosaic_0001>
module attributes {stable_mosaic.version = 11 : i64} {
  func.func @critic_decoder_kernel(%arg0: i32, %arg1: memref<8x8x32xf32, #tpu.memory_space<vmem>>, %arg2: memref<32x32xf32, #tpu.memory_space<vmem>>, %arg3: memref<1x32xf32, #tpu.memory_space<vmem>>, %arg4: memref<32x16xf32, #tpu.memory_space<vmem>>, %arg5: memref<1x16xf32, #tpu.memory_space<vmem>>, %arg6: memref<1x16xf32, #tpu.memory_space<vmem>>, %arg7: memref<1xf32, #tpu.memory_space<smem>>, %arg8: memref<8x128xf32, #tpu.memory_space<vmem>>) attributes {dimension_semantics = [#tpu.dimension_semantics<parallel>], iteration_bounds = array<i64: 2>, scalar_prefetch = 0 : i64, scratch_operands = 0 : i64, tpu.core_type = #tpu.core_type<tc>, window_params = [{transform_indices = @transform_0, window_bounds = array<i64: 8, 8, 32>}, {pipeline_mode = #tpu.pipeline_mode<synchronous>, transform_indices = @transform_1, window_bounds = array<i64: 32, 32>}, {pipeline_mode = #tpu.pipeline_mode<synchronous>, transform_indices = @transform_2, window_bounds = array<i64: 1, 32>}, {pipeline_mode = #tpu.pipeline_mode<synchronous>, transform_indices = @transform_3, window_bounds = array<i64: 32, 16>}, {pipeline_mode = #tpu.pipeline_mode<synchronous>, transform_indices = @transform_4, window_bounds = array<i64: 1, 16>}, {pipeline_mode = #tpu.pipeline_mode<synchronous>, transform_indices = @transform_5, window_bounds = array<i64: 1, 16>}, {transform_indices = @transform_6, window_bounds = array<i64: 1>}, {transform_indices = @transform_7, window_bounds = array<i64: 8, 128>}]} {
    %c0 = arith.constant 0 : index
    %c0_0 = arith.constant 0 : index
    %c0_1 = arith.constant 0 : index
    %0 = vector.load %arg1[%c0, %c0_0, %c0_1] : memref<8x8x32xf32, #tpu.memory_space<vmem>>, vector<8x8x32xf32>
    %cst = arith.constant dense<0.000000e+00> : vector<8x32xf32>
    %1 = vector.multi_reduction <add>, %0, %cst [1] : vector<8x8x32xf32> to vector<8x32xf32>
    %cst_2 = arith.constant 8.000000e+00 : f32
    %2 = vector.broadcast %cst_2 : f32 to vector<8x32xf32>
    %3 = arith.divf %1, %2 : vector<8x32xf32>
    %c0_3 = arith.constant 0 : index
    %c0_4 = arith.constant 0 : index
    %4 = vector.load %arg2[%c0_3, %c0_4] : memref<32x32xf32, #tpu.memory_space<vmem>>, vector<32x32xf32>
    %cst_5 = arith.constant dense<0.000000e+00> : vector<8x32xf32>
    %5 = tpu.matmul %3, %4, %cst_5 {dimension_numbers = #tpu.dot_dimension_numbers<[1], [0], [0], [1], [0, 0, 1, 1], [], []>} : vector<8x32xf32>, vector<32x32xf32>, vector<8x32xf32> -> vector<8x32xf32>
    %c0_6 = arith.constant 0 : index
    %c0_7 = arith.constant 0 : index
    %6 = vector.load %arg3[%c0_6, %c0_7] : memref<1x32xf32, #tpu.memory_space<vmem>>, vector<1x32xf32>
    %7 = vector.broadcast %6 : vector<1x32xf32> to vector<8x32xf32>
    %8 = arith.addf %5, %7 : vector<8x32xf32>
    %cst_8 = arith.constant 0.000000e+00 : f32
    %9 = vector.broadcast %cst_8 : f32 to vector<8x32xf32>
    %10 = arith.maximumf %8, %9 : vector<8x32xf32>
    %c0_9 = arith.constant 0 : index
    %c0_10 = arith.constant 0 : index
    %11 = vector.load %arg4[%c0_9, %c0_10] : memref<32x16xf32, #tpu.memory_space<vmem>>, vector<32x16xf32>
    %cst_11 = arith.constant dense<0.000000e+00> : vector<8x16xf32>
    %12 = tpu.matmul %10, %11, %cst_11 {dimension_numbers = #tpu.dot_dimension_numbers<[1], [0], [0], [1], [0, 0, 1, 1], [], []>} : vector<8x32xf32>, vector<32x16xf32>, vector<8x16xf32> -> vector<8x16xf32>
    %c0_12 = arith.constant 0 : index
    %c0_13 = arith.constant 0 : index
    %13 = vector.load %arg5[%c0_12, %c0_13] : memref<1x16xf32, #tpu.memory_space<vmem>>, vector<1x16xf32>
    %14 = vector.broadcast %13 : vector<1x16xf32> to vector<8x16xf32>
    %15 = arith.addf %12, %14 : vector<8x16xf32>
    %cst_14 = arith.constant 0.000000e+00 : f32
    %16 = vector.broadcast %cst_14 : f32 to vector<8x16xf32>
    %17 = arith.maximumf %15, %16 : vector<8x16xf32>
    %c0_15 = arith.constant 0 : index
    %c0_16 = arith.constant 0 : index
    %18 = vector.load %arg6[%c0_15, %c0_16] : memref<1x16xf32, #tpu.memory_space<vmem>>, vector<1x16xf32>
    %19 = vector.broadcast %18 : vector<1x16xf32> to vector<8x16xf32>
    %20 = arith.mulf %17, %19 : vector<8x16xf32>
    %cst_17 = arith.constant dense<0.000000e+00> : vector<8xf32>
    %21 = vector.multi_reduction <add>, %20, %cst_17 [1] : vector<8x16xf32> to vector<8xf32>
    %22 = vector.shape_cast %21 : vector<8xf32> to vector<8x1xf32>
    %c0_18 = arith.constant 0 : index
    %23 = memref.load %arg7[%c0_18] : memref<1xf32, #tpu.memory_space<smem>>
    %24 = vector.broadcast %23 : f32 to vector<8x1xf32>
    %25 = arith.addf %22, %24 : vector<8x1xf32>
    %26 = vector.shape_cast %25 : vector<8x1xf32> to vector<8x1xf32>
    %27 = vector.broadcast %26 : vector<8x1xf32> to vector<8x128xf32>
    %c0_19 = arith.constant 0 : index
    %c0_20 = arith.constant 0 : index
    %28 = vector.load %arg8[%c0_19, %c0_20] : memref<8x128xf32, #tpu.memory_space<vmem>>, vector<8x128xf32>
    tpu.vector_store %arg8[%c0_19, %c0_20], %27 {strides = array<i32>} : memref<8x128xf32, #tpu.memory_space<vmem>>, vector<8x128xf32>,
    return
  }
  func.func @transform_0(%arg0: i32) -> (i32, i32, i32) {
    %c0_i32 = arith.constant 0 : i32
    %c0_i32_0 = arith.constant 0 : i32
    %c0_i32_1 = arith.constant 0 : i32
    return %arg0, %c0_i32, %c0_i32_0 : i32, i32, i32
  }
  func.func @transform_1(%arg0: i32) -> (i32, i32) {
    %c0_i32 = arith.constant 0 : i32
    %c0_i32_0 = arith.constant 0 : i32
    %c0_i32_1 = arith.constant 0 : i32
    return %c0_i32, %c0_i32_0 : i32, i32
  }
  func.func @transform_2(%arg0: i32) -> (i32, i32) {
    %c0_i32 = arith.constant 0 : i32
    %c0_i32_0 = arith.constant 0 : i32
    %c0_i32_1 = arith.constant 0 : i32
    return %c0_i32, %c0_i32_0 : i32, i32
  }
  func.func @transform_3(%arg0: i32) -> (i32, i32) {
    %c0_i32 = arith.constant 0 : i32
    %c0_i32_0 = arith.constant 0 : i32
    %c0_i32_1 = arith.constant 0 : i32
    return %c0_i32, %c0_i32_0 : i32, i32
  }
  func.func @transform_4(%arg0: i32) -> (i32, i32) {
    %c0_i32 = arith.constant 0 : i32
    %c0_i32_0 = arith.constant 0 : i32
    %c0_i32_1 = arith.constant 0 : i32
    return %c0_i32, %c0_i32_0 : i32, i32
  }
  func.func @transform_5(%arg0: i32) -> (i32, i32) {
    %c0_i32 = arith.constant 0 : i32
    %c0_i32_0 = arith.constant 0 : i32
    %c0_i32_1 = arith.constant 0 : i32
    return %c0_i32, %c0_i32_0 : i32, i32
  }
  func.func @transform_6(%arg0: i32) -> i32 {
    %c0_i32 = arith.constant 0 : i32
    %c0_i32_0 = arith.constant 0 : i32
    return %c0_i32 : i32
  }
  func.func @transform_7(%arg0: i32) -> (i32, i32) {
    %c0_i32 = arith.constant 0 : i32
    %c0_i32_0 = arith.constant 0 : i32
    return %arg0, %c0_i32 : i32, i32
  }
}

</mosaic_0001>

<llo_original>
// kernel: tpu_custom_call.1
$region0: #{tpu_custom_call.1}
  #allocation0 [shape = 'u32[]', space=smem, size = 0x4, offset = 0x4, fixed_abs, tag = 'smem constant byte address 0x4 - core index']
  #allocation1 [shape = 'u32[144,128]{1,0:T(1,128)}', space=vmem, size = 0x12000, scoped, tag = 'internal scratch']
  #allocation2 [shape = 'f32[1]{0:T(128)S(6)}', space=smem, size = 0x200, scoped, tag = 'scoped memory for tpu_custom_call.1']
  %s0 = inlined_call_operand.hbm [shape: f32[16,8,32], index: 0, kind: input, shape index: {}]
  %s1 = inlined_call_operand.vmem [shape: f32[32,32], index: 1, kind: input, shape index: {}]
  %s2 = inlined_call_operand.vmem [shape: f32[1,32], index: 2, kind: input, shape index: {}]
  %s3 = inlined_call_operand.vmem [shape: f32[32,16], index: 3, kind: input, shape index: {}]
  %s4 = inlined_call_operand.vmem [shape: f32[1,16], index: 4, kind: input, shape index: {}]
  %s5 = inlined_call_operand.vmem [shape: f32[1,16], index: 5, kind: input, shape index: {}]
  %s6 = inlined_call_operand.<no memory space> [shape: f32[1], index: 6, kind: input, shape index: {}]
  %s7 = inlined_call_operand.hbm [shape: f32[16,128], index: 7, kind: output, shape index: {}]
  %s8 = sld [smem:[#allocation0]]
  $region65: #{tpu_custom_call.1} parent=0
    _
  %s10 = ssub.s32 1, %s8
  %s11 = scalar_select 0, %s10, %s8
  %12 = sst [smem:[#allocation2]] %s6
  $region1: #{tpu_custom_call.1} parent=0
    #allocation3 [shape = 'u8[65536]{0}', space=vmem, size = 0x10000, scoped, tag = 'input window, operand 0']
    #allocation4 [shape = 's32[2]{0}', space=sflag, size = 0x8, scoped, tag = 'scoped memory for tpu_custom_call.1']
    #allocation5 [shape = 's32[2]{0}', space=sflag, size = 0x8, scoped, tag = 'scoped memory for tpu_custom_call.1']
    #allocation6 [shape = 'u8[8192]{0}', space=vmem, size = 0x2000, scoped, tag = 'output window, operand 0']
    %13 = vsyncpa [#allocation4], 0
    %s14 = scalar_lea.sflag [#allocation4], 1
    %15 = vsyncpa %s14, 0
    %16 = vsyncpa [#allocation5], 0
    %s17 = scalar_lea.sflag [#allocation5], 1
    %18 = vsyncpa %s17, 0
    loop: start=0, step=1, limit=4
    $region2: #{tpu_custom_call.1} parent=1 // loop_pre_header
      _
    $region3: #{tpu_custom_call.1} parent=1 // loop_header
      %s20 = sphi 0, %s24
      %p21 = scmp.ge.s32.totalorder %s20, 4
      %s30 = sphi 0, %s32
      %s33 = sphi 0, %s30
      %s34 = sphi 0, %s33
      %s50 = sphi 0, %s34
      %s54 = sphi 0, %s54
      %s56 = sphi 0, %s54
      %s57 = sphi 0, %s56
      %s71 = sphi 0, %s57
      %s75 = sphi 0, %s75
      %s77 = sphi 0, %s75
      %s78 = sphi 0, %s77
      %s92 = sphi 0, %s78
      %s96 = sphi 0, %s96
      %s98 = sphi 0, %s96
      %s99 = sphi 0, %s98
      %s113 = sphi 0, %s99
      %s117 = sphi 0, %s117
      %s119 = sphi 0, %s117
      %s120 = sphi 0, %s119
      %s134 = sphi 0, %s120
      %s138 = sphi 0, %s138
      %s140 = sphi 0, %s138
      %s141 = sphi 0, %s140
      %s155 = sphi 0, %s141
      %s159 = sphi 0, %s159
      %s161 = sphi 0, %s159
      %s162 = sphi 0, %s161
      %s176 = sphi 0, %s162
      %s182 = sphi 0, %s184
      %s185 = sphi 0, %s182
      %s186 = sphi 0, %s185
      %s202 = sphi 0, %s186
    $region4: #{tpu_custom_call.1} parent=1 // loop_header_branch
      %23 = sbr.rel (%p21) target = $region8
    $region5: #{tpu_custom_call.1} parent=1 // loop_body
      %s25 = ssub.s32 %s20, 1
      %s26 = ssub.s32 %s20, 2
      %s27 = sadd.s32 %s20, 1
      %s28 = ssub.s32 %s20, %s27
      %p29 = scmp.eq.s32.totalorder %s28, 0
      %s31 = sadd.s32 %s30, 1
      %s32 = scalar_select %p29, %s30, %s31
      %p35 = pneg %p29
      %p36 = scmp.eq.s32.totalorder %s20, 1
      %p37 = por %p35, %p36
      %p38 = scmp.ne.s32.totalorder %s30, %s33
      %p39 = scmp.eq.s32.totalorder %s20, 0
      %p40 = por %p38, %p39
      %p41 = scmp.ne.s32.totalorder %s30, %s33
      %p42 = scmp.eq.s32.totalorder %s25, 1
      %p43 = por %p41, %p42
      %p44 = scmp.ne.s32.totalorder %s33, %s34
      %p45 = scmp.eq.s32.totalorder %s25, 0
      %p46 = por %p44, %p45
      %p47 = scmp.ne.s32.totalorder %s33, %s34
      %p48 = scmp.eq.s32.totalorder %s26, 1
      %p49 = por %p47, %p48
      %p51 = scmp.ne.s32.totalorder %s34, %s50
      %p52 = scmp.eq.s32.totalorder %s26, 0
      %p53 = por %p51, %p52
      %s55 = sadd.s32 %s54, 1
      %p58 = scmp.eq.s32.totalorder %s20, 1
      %p59 = scmp.ne.s32.totalorder %s54, %s56
      %p60 = scmp.eq.s32.totalorder %s20, 0
      %p61 = por %p59, %p60
      %p62 = scmp.ne.s32.totalorder %s54, %s56
      %p63 = scmp.eq.s32.totalorder %s25, 1
      %p64 = por %p62, %p63
      %p65 = scmp.ne.s32.totalorder %s56, %s57
      %p66 = scmp.eq.s32.totalorder %s25, 0
      %p67 = por %p65, %p66
      %p68 = scmp.ne.s32.totalorder %s56, %s57
      %p69 = scmp.eq.s32.totalorder %s26, 1
      %p70 = por %p68, %p69
      %p72 = scmp.ne.s32.totalorder %s57, %s71
      %p73 = scmp.eq.s32.totalorder %s26, 0
      %p74 = por %p72, %p73
      %s76 = sadd.s32 %s75, 1
      %p79 = scmp.eq.s32.totalorder %s20, 1
      %p80 = scmp.ne.s32.totalorder %s75, %s77
      %p81 = scmp.eq.s32.totalorder %s20, 0
      %p82 = por %p80, %p81
      %p83 = scmp.ne.s32.totalorder %s75, %s77
      %p84 = scmp.eq.s32.totalorder %s25, 1
      %p85 = por %p83, %p84
      %p86 = scmp.ne.s32.totalorder %s77, %s78
      %p87 = scmp.eq.s32.totalorder %s25, 0
      %p88 = por %p86, %p87
      %p89 = scmp.ne.s32.totalorder %s77, %s78
      %p90 = scmp.eq.s32.totalorder %s26, 1
      %p91 = por %p89, %p90
      %p93 = scmp.ne.s32.totalorder %s78, %s92
      %p94 = scmp.eq.s32.totalorder %s26, 0
      %p95 = por %p93, %p94
      %s97 = sadd.s32 %s96, 1
      %p100 = scmp.eq.s32.totalorder %s20, 1
      %p101 = scmp.ne.s32.totalorder %s96, %s98
      %p102 = scmp.eq.s32.totalorder %s20, 0
      %p103 = por %p101, %p102
      %p104 = scmp.ne.s32.totalorder %s96, %s98
      %p105 = scmp.eq.s32.totalorder %s25, 1
      %p106 = por %p104, %p105
      %p107 = scmp.ne.s32.totalorder %s98, %s99
      %p108 = scmp.eq.s32.totalorder %s25, 0
      %p109 = por %p107, %p108
      %p110 = scmp.ne.s32.totalorder %s98, %s99
      %p111 = scmp.eq.s32.totalorder %s26, 1
      %p112 = por %p110, %p111
      %p114 = scmp.ne.s32.totalorder %s99, %s113
      %p115 = scmp.eq.s32.totalorder %s26, 0
      %p116 = por %p114, %p115
      %s118 = sadd.s32 %s117, 1
      %p121 = scmp.eq.s32.totalorder %s20, 1
      %p122 = scmp.ne.s32.totalorder %s117, %s119
      %p123 = scmp.eq.s32.totalorder %s20, 0
      %p124 = por %p122, %p123
      %p125 = scmp.ne.s32.totalorder %s117, %s119
      %p126 = scmp.eq.s32.totalorder %s25, 1
      %p127 = por %p125, %p126
      %p128 = scmp.ne.s32.totalorder %s119, %s120
      %p129 = scmp.eq.s32.totalorder %s25, 0
      %p130 = por %p128, %p129
      %p131 = scmp.ne.s32.totalorder %s119, %s120
      %p132 = scmp.eq.s32.totalorder %s26, 1
      %p133 = por %p131, %p132
      %p135 = scmp.ne.s32.totalorder %s120, %s134
      %p136 = scmp.eq.s32.totalorder %s26, 0
      %p137 = por %p135, %p136
      %s139 = sadd.s32 %s138, 1
      %p142 = scmp.eq.s32.totalorder %s20, 1
      %p143 = scmp.ne.s32.totalorder %s138, %s140
      %p144 = scmp.eq.s32.totalorder %s20, 0
      %p145 = por %p143, %p144
      %p146 = scmp.ne.s32.totalorder %s138, %s140
      %p147 = scmp.eq.s32.totalorder %s25, 1
      %p148 = por %p146, %p147
      %p149 = scmp.ne.s32.totalorder %s140, %s141
      %p150 = scmp.eq.s32.totalorder %s25, 0
      %p151 = por %p149, %p150
      %p152 = scmp.ne.s32.totalorder %s140, %s141
      %p153 = scmp.eq.s32.totalorder %s26, 1
      %p154 = por %p152, %p153
      %p156 = scmp.ne.s32.totalorder %s141, %s155
      %p157 = scmp.eq.s32.totalorder %s26, 0
      %p158 = por %p156, %p157
      %s160 = sadd.s32 %s159, 1
      %p163 = scmp.eq.s32.totalorder %s20, 1
      %p164 = scmp.ne.s32.totalorder %s159, %s161
      %p165 = scmp.eq.s32.totalorder %s20, 0
      %p166 = por %p164, %p165
      %p167 = scmp.ne.s32.totalorder %s159, %s161
      %p168 = scmp.eq.s32.totalorder %s25, 1
      %p169 = por %p167, %p168
      %p170 = scmp.ne.s32.totalorder %s161, %s162
      %p171 = scmp.eq.s32.totalorder %s25, 0
      %p172 = por %p170, %p171
      %p173 = scmp.ne.s32.totalorder %s161, %s162
      %p174 = scmp.eq.s32.totalorder %s26, 1
      %p175 = por %p173, %p174
      %p177 = scmp.ne.s32.totalorder %s162, %s176
      %p178 = scmp.eq.s32.totalorder %s26, 0
      %p179 = por %p177, %p178
      %s180 = ssub.s32 %s20, %s27
      %p181 = scmp.eq.s32.totalorder %s180, 0
      %s183 = sadd.s32 %s182, 1
      %s184 = scalar_select %p181, %s182, %s183
      %p187 = pneg %p181
      %p188 = scmp.eq.s32.totalorder %s20, 1
      %p189 = por %p187, %p188
      %p190 = scmp.ne.s32.totalorder %s182, %s185
      %p191 = scmp.eq.s32.totalorder %s20, 0
      %p192 = por %p190, %p191
      %p193 = scmp.ne.s32.totalorder %s182, %s185
      %p194 = scmp.eq.s32.totalorder %s25, 1
      %p195 = por %p193, %p194
      %p196 = scmp.ne.s32.totalorder %s185, %s186
      %p197 = scmp.eq.s32.totalorder %s25, 0
      %p198 = por %p196, %p197
      %p199 = scmp.ne.s32.totalorder %s185, %s186
      %p200 = scmp.eq.s32.totalorder %s26, 1
      %p201 = por %p199, %p200
      %p203 = scmp.ne.s32.totalorder %s186, %s202
      %p204 = scmp.eq.s32.totalorder %s26, 0
      %p205 = por %p203, %p204
      %p206 = scmp.le.s32.totalorder 1, %s20
      %p207 = scmp.lt.s32.totalorder %s20, 3
      %p208 = pnand %p206, %p207
      %p209 = pneg %p208
      // Predicated region
      $region9: #{tpu_custom_call.1} parent=5 // pred_check
        _
      $region10: #{tpu_custom_call.1} parent=5 // pred_check_branch
        %211 = sbr.rel (%p208) target = $region12
      $region11: #{tpu_custom_call.1} parent=5 // pred_region
        %s212 = ssub.s32 %s20, 1
        // Predicated region
        $region13: #{tpu_custom_call.1} parent=11 // pred_check
          %p213 = pneg %p67
        $region14: #{tpu_custom_call.1} parent=11 // pred_check_branch
          %215 = sbr.rel (%p213) target = $region16
        $region15: #{tpu_custom_call.1} parent=11 // pred_region
          _
        $region16: #{tpu_custom_call.1} parent=11 // pred_fallthru
          _
        // Predicated region
        $region17: #{tpu_custom_call.1} parent=11 // pred_check
          %p216 = pneg %p88
        $region18: #{tpu_custom_call.1} parent=11 // pred_check_branch
          %218 = sbr.rel (%p216) target = $region20
        $region19: #{tpu_custom_call.1} parent=11 // pred_region
          _
        $region20: #{tpu_custom_call.1} parent=11 // pred_fallthru
          _
        // Predicated region
        $region21: #{tpu_custom_call.1} parent=11 // pred_check
          %p219 = pneg %p109
        $region22: #{tpu_custom_call.1} parent=11 // pred_check_branch
          %221 = sbr.rel (%p219) target = $region24
        $region23: #{tpu_custom_call.1} parent=11 // pred_region
          _
        $region24: #{tpu_custom_call.1} parent=11 // pred_fallthru
          _
        // Predicated region
        $region25: #{tpu_custom_call.1} parent=11 // pred_check
          %p222 = pneg %p130
        $region26: #{tpu_custom_call.1} parent=11 // pred_check_branch
          %224 = sbr.rel (%p222) target = $region28
        $region27: #{tpu_custom_call.1} parent=11 // pred_region
          _
        $region28: #{tpu_custom_call.1} parent=11 // pred_fallthru
          _
        // Predicated region
        $region29: #{tpu_custom_call.1} parent=11 // pred_check
          %p225 = pneg %p151
        $region30: #{tpu_custom_call.1} parent=11 // pred_check_branch
          %227 = sbr.rel (%p225) target = $region32
        $region31: #{tpu_custom_call.1} parent=11 // pred_region
          _
        $region32: #{tpu_custom_call.1} parent=11 // pred_fallthru
          _
        // Predicated region
        $region33: #{tpu_custom_call.1} parent=11 // pred_check
          %p228 = pneg %p172
        $region34: #{tpu_custom_call.1} parent=11 // pred_check_branch
          %230 = sbr.rel (%p228) target = $region36
        $region35: #{tpu_custom_call.1} parent=11 // pred_region
          _
        $region36: #{tpu_custom_call.1} parent=11 // pred_fallthru
          _
      $region12: #{tpu_custom_call.1} parent=5 // pred_fallthru
        _
      %p231 = scmp.lt.s32.totalorder %s20, 2
      // Predicated region
      $region37: #{tpu_custom_call.1} parent=5 // pred_check
        %p232 = pneg %p231
      $region38: #{tpu_custom_call.1} parent=5 // pred_check_branch
        %234 = sbr.rel (%p232) target = $region40
      $region39: #{tpu_custom_call.1} parent=5 // pred_region
        // Predicated region
        $region41: #{tpu_custom_call.1} parent=39 // pred_check
          %p235 = pneg %p40
        $region42: #{tpu_custom_call.1} parent=39 // pred_check_branch
          %237 = sbr.rel (%p235) target = $region44
        $region43: #{tpu_custom_call.1} parent=39 // pred_region
          %s238 = sand.u32 %s30, 1
          %s239 = scalar_lea.sflag [#allocation4], %s238
          %s240 = sand.u32 %s30, 1
          %s241 = smul.addr %s240, 64
          %s242 = scalar_lea.vmem [#allocation3], %s241
          %s243 = smul.u32 8, %s20
          %s245 = ssub.s32 1024, 1024
          %246 = vsyncadd %s239, %s245
          %s247 = smul.addr %s243, 128
          %s248 = scalar_lea.hbm %s0, %s247
          %s249 = sshll.u32 %s242, 4
          %s250 = int_to_ptr.vmem [resolvable:$true] %s249
          %255 = dma.hbm_to_vmem [thread:$0]  %s248, 1024, %s250, %s239, 128, 128, 8
        $region44: #{tpu_custom_call.1} parent=39 // pred_fallthru
          _
      $region40: #{tpu_custom_call.1} parent=5 // pred_fallthru
        _
      %p256 = scmp.le.s32.totalorder 1, %s20
      %p257 = scmp.lt.s32.totalorder %s20, 3
      %p258 = pnand %p256, %p257
      %p259 = pneg %p258
      // Predicated region
      $region45: #{tpu_custom_call.1} parent=5 // pred_check
        _
      $region46: #{tpu_custom_call.1} parent=5 // pred_check_branch
        %261 = sbr.rel (%p258) target = $region48
      $region47: #{tpu_custom_call.1} parent=5 // pred_region
        %s262 = ssub.s32 %s20, 1
        %s263 = sand.u32 %s33, 1
        %s264 = scalar_lea.sflag [#allocation4], %s263
        %s265 = sand.u32 %s33, 1
        %s266 = smul.addr %s265, 64
        %s267 = scalar_lea.vmem [#allocation3], %s266
        // Predicated region
        $region49: #{tpu_custom_call.1} parent=47 // pred_check
          %p268 = pneg %p46
        $region50: #{tpu_custom_call.1} parent=47 // pred_check_branch
          %270 = sbr.rel (%p268) target = $region52
        $region51: #{tpu_custom_call.1} parent=47 // pred_region
          %271 = dma.done %s264, 1024
        $region52: #{tpu_custom_call.1} parent=47 // pred_fallthru
          _
        %s272 = sand.u32 %s33, 1
        %s273 = scalar_lea.sflag [#allocation4], %s272
        %s274 = sand.u32 %s33, 1
        %s275 = smul.addr %s274, 64
        %s276 = scalar_lea.vmem [#allocation3], %s275
        %p277 = pneg %p46
        %p278 = pneg %p43
        %p279 = pneg %p67
        %p280 = pneg %p64
        %p281 = pneg %p88
        %p282 = pneg %p85
        %p283 = pneg %p109
        %p284 = pneg %p106
        %p285 = pneg %p130
        %p286 = pneg %p127
        %p287 = pneg %p151
        %p288 = pneg %p148
        %p289 = pneg %p172
        %p290 = pneg %p169
        %p291 = pneg %p198
        %p292 = pneg %p195
        %s293 = sand.u32 %s185, 1
        %s294 = scalar_lea.sflag [#allocation5], %s293
        %s295 = sand.u32 %s185, 1
        %s296 = smul.addr %s295, 8
        %s297 = scalar_lea.vmem [#allocation6], %s296
        %s298 = smul.u32 8, %s25
        %v299 = vld [vmem:[%s267] sm:$0xff]
        %v300 = vld [vmem:[%s267 + $0x8] sm:$0xff]
        %v301 = vld [vmem:[%s267 + $0x10] sm:$0xff]
        %v302 = vld [vmem:[%s267 + $0x18] sm:$0xff]
        %v303 = vld [vmem:[%s267 + $0x20] sm:$0xff]
        %v304 = vld [vmem:[%s267 + $0x28] sm:$0xff]
        %v305 = vld [vmem:[%s267 + $0x30] sm:$0xff]
        %v306 = vld [vmem:[%s267 + $0x38] sm:$0xff]
        %vm307 = vcmask 261120
        %v308 = vsel %vm307, %v299, 0.0
        %v309 = vrot.slane %v308, 4
        %v310 = vadd.f32 %v308, %v309
        %v311 = vrot.slane %v310, 2
        %v312 = vadd.f32 %v310, %v311
        %v313 = vrot.slane %v312, 1
        %v314 = vadd.f32 %v312, %v313
        %v315 = vsel %vm307, %v300, 0.0
        %v316 = vrot.slane %v315, 4
        %v317 = vadd.f32 %v315, %v316
        %v318 = vrot.slane %v317, 2
        %v319 = vadd.f32 %v317, %v318
        %v320 = vrot.slane %v319, 1
        %v321 = vadd.f32 %v319, %v320
        %v322 = vsel %vm307, %v301, 0.0
        %v323 = vrot.slane %v322, 4
        %v324 = vadd.f32 %v322, %v323
        %v325 = vrot.slane %v324, 2
        %v326 = vadd.f32 %v324, %v325
        %v327 = vrot.slane %v326, 1
        %v328 = vadd.f32 %v326, %v327
        %v329 = vsel %vm307, %v302, 0.0
        %v330 = vrot.slane %v329, 4
        %v331 = vadd.f32 %v329, %v330
        %v332 = vrot.slane %v331, 2
        %v333 = vadd.f32 %v331, %v332
        %v334 = vrot.slane %v333, 1
        %v335 = vadd.f32 %v333, %v334
        %v336 = vsel %vm307, %v303, 0.0
        %v337 = vrot.slane %v336, 4
        %v338 = vadd.f32 %v336, %v337
        %v339 = vrot.slane %v338, 2
        %v340 = vadd.f32 %v338, %v339
        %v341 = vrot.slane %v340, 1
        %v342 = vadd.f32 %v340, %v341
        %v343 = vsel %vm307, %v304, 0.0
        %v344 = vrot.slane %v343, 4
        %v345 = vadd.f32 %v343, %v344
        %v346 = vrot.slane %v345, 2
        %v347 = vadd.f32 %v345, %v346
        %v348 = vrot.slane %v347, 1
        %v349 = vadd.f32 %v347, %v348
        %v350 = vsel %vm307, %v305, 0.0
        %v351 = vrot.slane %v350, 4
        %v352 = vadd.f32 %v350, %v351
        %v353 = vrot.slane %v352, 2
        %v354 = vadd.f32 %v352, %v353
        %v355 = vrot.slane %v354, 1
        %v356 = vadd.f32 %v354, %v355
        %v357 = vsel %vm307, %v306, 0.0
        %v358 = vrot.slane %v357, 4
        %v359 = vadd.f32 %v357, %v358
        %v360 = vrot.slane %v359, 2
        %v361 = vadd.f32 %v359, %v360
        %v362 = vrot.slane %v361, 1
        %v363 = vadd.f32 %v361, %v362
        %v364 = vrcp.pop 8.0
        %v365 = vmul.f32 %v314, %v364
        %v366 = vmul.f32 %v321, %v364
        %v367 = vmul.f32 %v328, %v364
        %v368 = vmul.f32 %v335, %v364
        %v369 = vmul.f32 %v342, %v364
        %v370 = vmul.f32 %v349, %v364
        %v371 = vmul.f32 %v356, %v364
        %v372 = vmul.f32 %v363, %v364
        %v373 = vld [vmem:[%s1] sm:$0xff]
        %v374 = vld [vmem:[%s1 + $0x8] sm:$0xff]
        %v375 = vld [vmem:[%s1 + $0x10] sm:$0xff]
        %v376 = vld [vmem:[%s1 + $0x18] sm:$0xff]
        %v377 = vld [vmem:[%s2] sm:$0x1]
        %v379 = vlaneseq
        %v380 = vshrl.u32 %v379, 7
        %v381 = vsub.s32 0, %v380
        %v382 = vrot.slane %v377, %v381
        %vm392 = vcmask 1041409
        %v393 = vsel %vm392, %v366, %v365
        %vm394 = vcmask 1042434
        %v395 = vsel %vm394, %v367, %v393
        %vm396 = vcmask 1043459
        %v397 = vsel %vm396, %v368, %v395
        %vm398 = vcmask 1044484
        %v399 = vsel %vm398, %v369, %v397
        %vm400 = vcmask 1045509
        %v401 = vsel %vm400, %v370, %v399
        %vm402 = vcmask 1046534
        %v403 = vsel %vm402, %v371, %v401
        %vm404 = vcmask 1047559
        %v405 = vsel %vm404, %v372, %v403
        %v406 = vsel %vm307, %v405, 0
        %408 = vmatprep.subr.mxu0 0.0
        %409 = vmatpush1.msra.mxu0 %v373
        %410 = vmatprep.subr.mxu0 0.0
        %411 = vmatpush1.msra.mxu0 %v374
        %412 = vmatprep.subr.mxu0 0.0
        %413 = vmatpush1.msra.mxu0 %v375
        %414 = vmatprep.subr.mxu0 0.0
        %415 = vmatpush1.msra.mxu0 %v376
        %416 = vmatprep.subr.mxu0 0.0
        %417 = vmatpush1.msra.mxu0 0.0
        %418 = vmatprep.subr.mxu0 0.0
        %419 = vmatpush1.msra.mxu0 0.0
        %420 = vmatprep.subr.mxu0 0.0
        %421 = vmatpush1.msra.mxu0 0.0
        %422 = vmatprep.subr.mxu0 0.0
        %423 = vmatpush1.msra.mxu0 0.0
        %424 = vmatprep.subr.mxu0 0.0
        %425 = vmatpush1.msra.mxu0 0.0
        %426 = vmatprep.subr.mxu0 0.0
        %427 = vmatpush1.msra.mxu0 0.0
        %428 = vmatprep.subr.mxu0 0.0
        %429 = vmatpush1.msra.mxu0 0.0
        %430 = vmatprep.subr.mxu0 0.0
        %431 = vmatpush1.msra.mxu0 0.0
        %432 = vmatprep.subr.mxu0 0.0
        %433 = vmatpush1.msra.mxu0 0.0
        %434 = vmatprep.subr.mxu0 0.0
        %435 = vmatpush1.msra.mxu0 0.0
        %436 = vmatprep.subr.mxu0 0.0
        %437 = vmatpush1.msra.mxu0 0.0
        %438 = vmatprep.subr.mxu0 0.0
        %439 = vmatpush1.msra.mxu0 0.0
        %440 = vmatprep.subr.mxu0 0.0
        %441 = vmatpush1.msra.mxu0 0.0
        %442 = vmatprep.subr.mxu0 0.0
        %443 = vmatpush1.msra.mxu0 0.0
        %444 = vmatprep.subr.mxu0 0.0
        %445 = vmatpush1.msra.mxu0 0.0
        %446 = vmatprep.subr.mxu0 0.0
        %447 = vmatpush1.msra.mxu0 0.0
        %448 = vmatprep.subr.mxu0 0.0
        %449 = vmatpush1.msra.mxu0 0.0
        %450 = vmatprep.subr.mxu0 0.0
        %451 = vmatpush1.msra.mxu0 0.0
        %452 = vmatprep.subr.mxu0 0.0
        %453 = vmatpush1.msra.mxu0 0.0
        %454 = vmatprep.subr.mxu0 0.0
        %455 = vmatpush1.msra.mxu0 0.0
        %456 = vmatprep.subr.mxu0 0.0
        %457 = vmatpush1.msra.mxu0 0.0
        %458 = vmatprep.subr.mxu0 0.0
        %459 = vmatpush1.msra.mxu0 0.0
        %460 = vmatprep.subr.mxu0 0.0
        %461 = vmatpush1.msra.mxu0 0.0
        %462 = vmatprep.subr.mxu0 0.0
        %463 = vmatpush1.msra.mxu0 0.0
        %464 = vmatprep.subr.mxu0 0.0
        %465 = vmatpush1.msra.mxu0 0.0
        %466 = vmatprep.subr.mxu0 0.0
        %467 = vmatpush1.msra.mxu0 0.0
        %468 = vmatprep.subr.mxu0 0.0
        %469 = vmatpush1.msra.mxu0 0.0
        %470 = vmatprep.subr.mxu0 0.0
        %471 = vmatpush1.msra.mxu0 0.0
        %472 = vmatprep.mubr.f32.mxu0 0.0
        %473 = vmatmul.mubr.f32.gmra.mrb[0].mxu0 %v406
        %v474 = vpop.f32.mrb[0].mxu0
        %v475 = vadd.f32 %v382, %v474
        %v476 = vpop.f32.mrb[0].mxu0
        %477 = vdwg.mxu0
        %v478 = vmax.f32 %v475, 0.0
        %v479 = vld [vmem:[%s3] sm:$0xff]
        %v480 = vld [vmem:[%s3 + $0x8] sm:$0xff]
        %v481 = vld [vmem:[%s3 + $0x10] sm:$0xff]
        %v482 = vld [vmem:[%s3 + $0x18] sm:$0xff]
        %v483 = vld [vmem:[%s4] sm:$0x1]
        %v485 = vlaneseq
        %v486 = vshrl.u32 %v485, 7
        %v487 = vsub.s32 0, %v486
        %v488 = vrot.slane %v483, %v487
        %v491 = vsel %vm307, %v478, 0
        %493 = vmatprep.subr.mxu0 0.0
        %494 = vmatpush1.msra.mxu0 %v479
        %495 = vmatprep.subr.mxu0 0.0
        %496 = vmatpush1.msra.mxu0 %v480
        %497 = vmatprep.subr.mxu0 0.0
        %498 = vmatpush1.msra.mxu0 %v481
        %499 = vmatprep.subr.mxu0 0.0
        %500 = vmatpush1.msra.mxu0 %v482
        %501 = vmatprep.subr.mxu0 0.0
        %502 = vmatpush1.msra.mxu0 0.0
        %503 = vmatprep.subr.mxu0 0.0
        %504 = vmatpush1.msra.mxu0 0.0
        %505 = vmatprep.subr.mxu0 0.0
        %506 = vmatpush1.msra.mxu0 0.0
        %507 = vmatprep.subr.mxu0 0.0
        %508 = vmatpush1.msra.mxu0 0.0
        %509 = vmatprep.subr.mxu0 0.0
        %510 = vmatpush1.msra.mxu0 0.0
        %511 = vmatprep.subr.mxu0 0.0
        %512 = vmatpush1.msra.mxu0 0.0
        %513 = vmatprep.subr.mxu0 0.0
        %514 = vmatpush1.msra.mxu0 0.0
        %515 = vmatprep.subr.mxu0 0.0
        %516 = vmatpush1.msra.mxu0 0.0
        %517 = vmatprep.subr.mxu0 0.0
        %518 = vmatpush1.msra.mxu0 0.0
        %519 = vmatprep.subr.mxu0 0.0
        %520 = vmatpush1.msra.mxu0 0.0
        %521 = vmatprep.subr.mxu0 0.0
        %522 = vmatpush1.msra.mxu0 0.0
        %523 = vmatprep.subr.mxu0 0.0
        %524 = vmatpush1.msra.mxu0 0.0
        %525 = vmatprep.subr.mxu0 0.0
        %526 = vmatpush1.msra.mxu0 0.0
        %527 = vmatprep.subr.mxu0 0.0
        %528 = vmatpush1.msra.mxu0 0.0
        %529 = vmatprep.subr.mxu0 0.0
        %530 = vmatpush1.msra.mxu0 0.0
        %531 = vmatprep.subr.mxu0 0.0
        %532 = vmatpush1.msra.mxu0 0.0
        %533 = vmatprep.subr.mxu0 0.0
        %534 = vmatpush1.msra.mxu0 0.0
        %535 = vmatprep.subr.mxu0 0.0
        %536 = vmatpush1.msra.mxu0 0.0
        %537 = vmatprep.subr.mxu0 0.0
        %538 = vmatpush1.msra.mxu0 0.0
        %539 = vmatprep.subr.mxu0 0.0
        %540 = vmatpush1.msra.mxu0 0.0
        %541 = vmatprep.subr.mxu0 0.0
        %542 = vmatpush1.msra.mxu0 0.0
        %543 = vmatprep.subr.mxu0 0.0
        %544 = vmatpush1.msra.mxu0 0.0
        %545 = vmatprep.subr.mxu0 0.0
        %546 = vmatpush1.msra.mxu0 0.0
        %547 = vmatprep.subr.mxu0 0.0
        %548 = vmatpush1.msra.mxu0 0.0
        %549 = vmatprep.subr.mxu0 0.0
        %550 = vmatpush1.msra.mxu0 0.0
        %551 = vmatprep.subr.mxu0 0.0
        %552 = vmatpush1.msra.mxu0 0.0
        %553 = vmatprep.subr.mxu0 0.0
        %554 = vmatpush1.msra.mxu0 0.0
        %555 = vmatprep.subr.mxu0 0.0
        %556 = vmatpush1.msra.mxu0 0.0
        %557 = vmatprep.mubr.f32.mxu0 0.0
        %558 = vmatmul.mubr.f32.gmra.mrb[0].mxu0 %v491
        %v559 = vpop.f32.mrb[0].mxu0
        %v560 = vadd.f32 %v488, %v559
        %v561 = vpop.f32.mrb[0].mxu0
        %562 = vdwg.mxu0
        %v563 = vmax.f32 %v560, 0.0
        %v564 = vld [vmem:[%s5] sm:$0x1]
        %v566 = vlaneseq
        %v567 = vshrl.u32 %v566, 7
        %v568 = vsub.s32 0, %v567
        %v569 = vrot.slane %v564, %v568
        %v571 = vmul.f32 %v563, %v569
        %vm572 = vcmask 130048
        %v573 = vsel %vm572, %v571, 0.0
        %574 = vadd.xlane.f32.xlu0 %v573
        %v575 = vpop.xlane.xlu0 %574
        %s576 = sld [smem:[#allocation2]]
        %v577 = vstv %s576
        %v578 = vadd.f32 %v575, %v577
        %579 = vst [vmem:[%s297] sm:$0xff] %v578
        %s580 = sand.u32 %s185, 1
        %s581 = scalar_lea.sflag [#allocation5], %s580
        %s582 = sand.u32 %s185, 1
        %s583 = smul.addr %s582, 8
        %s584 = scalar_lea.vmem [#allocation6], %s583
        // Predicated region
        $region53: #{tpu_custom_call.1} parent=47 // pred_check
          %p585 = pneg %p195
        $region54: #{tpu_custom_call.1} parent=47 // pred_check_branch
          %587 = sbr.rel (%p585) target = $region56
        $region55: #{tpu_custom_call.1} parent=47 // pred_region
          %s589 = ssub.s32 128, 128
          %590 = vsyncadd %s581, %s589
          %s591 = smul.addr %s25, 128
          %s592 = scalar_lea.hbm %s7, %s591
          %s594 = sshll.u32 %s584, 4
          %s595 = int_to_ptr.vmem [resolvable:$true] %s594
          %597 = dma.vmem_to_hbm [thread:$0]  %s595, 128, %s592, %s581
        $region56: #{tpu_custom_call.1} parent=47 // pred_fallthru
          _
      $region48: #{tpu_custom_call.1} parent=5 // pred_fallthru
        _
      %p598 = scmp.le.s32.totalorder 2, %s20
      // Predicated region
      $region57: #{tpu_custom_call.1} parent=5 // pred_check
        %p599 = pneg %p598
      $region58: #{tpu_custom_call.1} parent=5 // pred_check_branch
        %601 = sbr.rel (%p599) target = $region60
      $region59: #{tpu_custom_call.1} parent=5 // pred_region
        %s602 = ssub.s32 %s20, 2
        // Predicated region
        $region61: #{tpu_custom_call.1} parent=59 // pred_check
          %p603 = pneg %p201
        $region62: #{tpu_custom_call.1} parent=59 // pred_check_branch
          %605 = sbr.rel (%p603) target = $region64
        $region63: #{tpu_custom_call.1} parent=59 // pred_region
          %s606 = sand.u32 %s186, 1
          %s607 = scalar_lea.sflag [#allocation5], %s606
          %s608 = sand.u32 %s186, 1
          %s609 = smul.addr %s608, 8
          %s610 = scalar_lea.vmem [#allocation6], %s609
          %611 = dma.done %s607, 128
        $region64: #{tpu_custom_call.1} parent=59 // pred_fallthru
          _
      $region60: #{tpu_custom_call.1} parent=5 // pred_fallthru
        _
    $region6: #{tpu_custom_call.1} parent=1 // loop_footer
      %s24 = sadd.s32 1, %s20
    $region7: #{tpu_custom_call.1} parent=1 // loop_footer_branch
      %19 = sbr.rel target = $region3
    $region8: #{tpu_custom_call.1} parent=1 // loop_exit
      _
    %612 = vsyncpa [#allocation4], 1
    %s613 = scalar_lea.sflag [#allocation4], 1
    %614 = vsyncpa %s613, 1
    %615 = vsyncpa [#allocation5], 1
    %s616 = scalar_lea.sflag [#allocation5], 1
    %617 = vsyncpa %s616, 1

</llo_original>
